<compile_context>
chip_gen: v7x
topology: tpu7x:2x2x1
jax: 0.10.0
libtpu: 0.0.40
codegen_flags: <defaults>
</compile_context>

<pallas_src>
import jax
import jax.numpy as jnp
import numpy as np
from jax.experimental import pallas as pl
from jax.experimental.pallas import tpu as pltpu


def _nonlocal_kernel(x_ref, phiT_ref, g_ref,
                     wt_ref, bt_ref, wo_ref, bo_ref,
                     o_ref):
    x = x_ref[0]                                    # (C_in, TN) f32
    xb = x.astype(jnp.bfloat16)                     # bf16 only for the matmul

    # theta 1x1 conv (softmax scale 1/sqrt(inner) already folded into wt/bt).
    theta = jnp.dot(wt_ref[...], xb,
                    preferred_element_type=jnp.float32) + bt_ref[...]
    theta = theta.astype(jnp.bfloat16)              # (C_inner, TN)

    phiT = phiT_ref[0]                              # (M, C_inner) bf16
    g = g_ref[0]                                    # (C_inner, M) bf16

    # Logits in (M, TN) orientation via a plain NN matmul (phi pre-transposed
    # on the host -> no per-tile XLU transpose here).
    a = jnp.dot(phiT, theta, preferred_element_type=jnp.float32)     # (M, TN)

    # Softmax over the key axis M (cheap sublane reductions).
    # TODO(synk): for large M, switch to an online-softmax loop over M-chunks
    # so the live (M, TN) f32 slab stays bounded (matters on v7x / v5e).
    a = a - jnp.max(a, axis=0, keepdims=True)
    e = jnp.exp(a)
    s = jnp.sum(e, axis=0, keepdims=True)           # (1, TN)

    # t = g @ e; softmax normalization deferred past both remaining matmuls
    # and applied as a single (1, TN) lane-vector scale at the end.
    t = jnp.dot(g, e.astype(jnp.bfloat16),
                preferred_element_type=jnp.float32)                  # (C_inner, TN)

    # Output 1x1 conv (eval-mode BN folded into wo/bo), deferred normalization,
    # bias, exact f32 residual.
    out = jnp.dot(wo_ref[...], t.astype(jnp.bfloat16),
                  preferred_element_type=jnp.float32)                # (C_out, TN)
    out = out * pl.reciprocal(s, approx=True) + bo_ref[...] + x
    o_ref[0] = out.astype(o_ref.dtype)


def _vmem_budget_bytes(c_in, c_out, c_inner, m, tn):
    """Per-step VMEM footprint estimate (double-buffered tiles + live slabs)."""
    f32, bf16 = 4, 2
    est = (
        2 * c_in * tn * f32                       # x tile (double-buffered)
        + 2 * c_out * tn * f32                    # out tile (double-buffered)
        + 2 * 2 * m * c_inner * bf16              # phiT + g blocks (double-buffered)
        + 2 * (c_inner * c_in + c_out * c_inner) * bf16   # weights
        + 2 * (c_inner + c_out) * f32                     # biases
        + 3 * m * tn * f32                        # live a / e slabs
        + 3 * c_inner * tn * f32                  # theta / t temporaries
        + 2 * c_out * tn * f32                    # out temporary
    )
    est = int(est * 1.5) + (4 << 20)              # regalloc / relayout headroom
    # >= scoped default on all gens, <= v7x per-TensorCore physical VMEM.
    return max(16 << 20, min(est, 64 << 20))


def nonlocal_block_forward(x, params, inner_plane, *, tile_n=256,
                           out_dtype=jnp.float32):
    """x: (B, C_in, H, W) NCHW float32. Returns (B, C_out, H, W) out_dtype."""
    B, C_in, H, W = x.shape
    C_inner = params["w_theta"].shape[0]
    C_out = params["w_out"].shape[0]
    assert C_out == C_in, "residual add requires out_plane == in_plane"
    N = H * W
    Hp, Wp = H // 2, W // 2                       # MaxPool2d(2,2) floors odd sizes
    M = Hp * Wp

    f32, bf16 = jnp.float32, jnp.bfloat16

    # ---- Small host-side preprocessing (weight-sized / N/4-sized data only) ----
    # 2x2 stride-2 maxpool (PyTorch floor semantics).
    # TODO(synk): fuse the maxpool + phi/g projection into the kernel (n==0
    # phase DMA of that batch's x) to drop this extra HBM read of x.
    mp = jnp.max(x[:, :, :2 * Hp, :2 * Wp].reshape(B, C_in, Hp, 2, Wp, 2),
                 axis=(3, 5)).reshape(B, C_in, M)                     # f32

    # phi / g 1x1 convs over the pooled map; phi stored pre-transposed so the
    # in-kernel logits matmul is plain NN.
    phiT = (jnp.einsum("oc,bcm->bmo", params["w_phi"], mp)
            + params["b_phi"].T[None]).astype(bf16)                   # (B, M, Ci)
    g = (jnp.einsum("oc,bcm->bom", params["w_g"], mp)
         + params["b_g"][None]).astype(bf16)                          # (B, Ci, M)

    # Weight folds: softmax scale into theta, eval-mode BN into the out conv.
    scale = inner_plane ** (-0.5)
    w_theta = (params["w_theta"] * scale).astype(bf16)
    b_theta = (params["b_theta"] * scale).astype(f32)
    w_out = (params["bn_scale"] * params["w_out"]).astype(bf16)
    b_out = (params["bn_scale"] * params["b_out"] + params["bn_shift"]).astype(f32)

    # ---- Query-dim tiling: lane-dense tiles; pad N up instead of tn = N. ----
    n128 = pl.cdiv(N, 128) * 128
    tn = tile_n if (tile_n <= n128 and n128 % tile_n == 0) else 128
    n_pad = pl.cdiv(N, tn) * tn

    x_flat = x.reshape(B, C_in, N)                # f32 -> no extra astype pass
    if n_pad != N:
        x_flat = jnp.pad(x_flat, ((0, 0), (0, 0), (0, n_pad - N)))

    grid = (B, n_pad // tn)
    full = lambda shape: pl.BlockSpec(shape, lambda b, n: (0,) * len(shape))

    out_flat = pl.pallas_call(
        _nonlocal_kernel,
        out_shape=jax.ShapeDtypeStruct((B, C_out, n_pad), out_dtype),
        grid_spec=pltpu.PrefetchScalarGridSpec(
            num_scalar_prefetch=0,
            grid=grid,
            in_specs=[
                pl.BlockSpec((1, C_in, tn), lambda b, n: (b, 0, n)),    # x tile (f32)
                # Blocks below change only with b -> the pipeline fetches them
                # once per batch.  TODO(synk): pipeline_mode=pl.Buffered(1) on
                # these + the weights would also halve their VMEM footprint.
                pl.BlockSpec((1, M, C_inner), lambda b, n: (b, 0, 0)),  # phi^T
                pl.BlockSpec((1, C_inner, M), lambda b, n: (b, 0, 0)),  # g
                full((C_inner, C_in)),      # w_theta (scale folded)
                full((C_inner, 1)),         # b_theta (scale folded)
                full((C_out, C_inner)),     # w_out (BN folded)
                full((C_out, 1)),           # b_out (BN folded)
            ],
            out_specs=pl.BlockSpec((1, C_out, tn), lambda b, n: (b, 0, n)),
        ),
        compiler_params=pltpu.CompilerParams(
            # No cross-iteration state -> both grid axes are parallel; v7x can
            # megacore-shard the query-tile axis even when B == 1.
            dimension_semantics=("parallel", "parallel"),
            vmem_limit_bytes=_vmem_budget_bytes(C_in, C_out, C_inner, M, tn),
        ),
    )(x_flat, phiT, g, w_theta, b_theta, w_out, b_out)

    return out_flat[:, :, :N].reshape(B, C_out, H, W)


def _reference_forward(x, params, inner_plane):
    """Pure-JAX f32 reference mirroring the PyTorch forward (eval-mode BN)."""
    B, C, H, W = x.shape
    mp = jnp.max(x.reshape(B, C, H // 2, 2, W // 2, 2), axis=(3, 5))

    def conv1x1(inp, w, b):
        Bc, Ci = inp.shape[0], inp.shape[1]
        return jnp.einsum("oc,bcn->bon", w, inp.reshape(Bc, Ci, -1)) + b[None]

    theta = conv1x1(x, params["w_theta"], params["b_theta"])          # (B,Ci,N)
    phi = conv1x1(mp, params["w_phi"], params["b_phi"])               # (B,Ci,M)
    g = conv1x1(mp, params["w_g"], params["b_g"])                     # (B,Ci,M)
    a = jnp.einsum("bcn,bcm->bnm", theta, phi) * inner_plane ** (-0.5)
    p = jax.nn.softmax(a, axis=-1)
    t = jnp.einsum("bcm,bnm->bcn", g, p)                              # (B,Ci,N)
    out = jnp.einsum("oc,bcn->bon", params["w_out"], t) + params["b_out"][None]
    out = out * params["bn_scale"][None] + params["bn_shift"][None]
    return out.reshape(B, -1, H, W) + x


def make_params(key, in_plane, out_plane, inner_plane):
    ks = jax.random.split(key, 8)
    std = 0.1
    p = {
        "w_theta": jax.random.normal(ks[0], (inner_plane, in_plane), jnp.float32) * std,
        "b_theta": jax.random.normal(ks[1], (inner_plane, 1), jnp.float32) * std,
        "w_phi":   jax.random.normal(ks[2], (inner_plane, in_plane), jnp.float32) * std,
        "b_phi":   jax.random.normal(ks[3], (inner_plane, 1), jnp.float32) * std,
        "w_g":     jax.random.normal(ks[4], (inner_plane, in_plane), jnp.float32) * std,
        "b_g":     jax.random.normal(ks[5], (inner_plane, 1), jnp.float32) * std,
        "w_out":   jax.random.normal(ks[6], (out_plane, inner_plane), jnp.float32) * std,
        "b_out":   jax.random.normal(ks[7], (out_plane, 1), jnp.float32) * std,
    }
    # BatchNorm2d eval-mode: gamma=1, beta=0, running_mean=0, running_var=1.
    gamma = jnp.ones((out_plane, 1), jnp.float32)
    beta = jnp.zeros((out_plane, 1), jnp.float32)
    rmean = jnp.zeros((out_plane, 1), jnp.float32)
    rvar = jnp.ones((out_plane, 1), jnp.float32)
    eps = 1e-5
    p["bn_scale"] = gamma / jnp.sqrt(rvar + eps)
    p["bn_shift"] = beta - rmean * p["bn_scale"]
    return p


if __name__ == "__main__":
    B, C_in, H, W = 2, 8, 16, 16
    C_out, C_inner = 8, 16   # residual add requires out_plane == in_plane

    key = jax.random.PRNGKey(0)
    kx, kp = jax.random.split(key)
    x = jax.random.normal(kx, (B, C_in, H, W), jnp.float32)
    params = make_params(kp, C_in, C_out, C_inner)

    out = jax.block_until_ready(nonlocal_block_forward(x, params, C_inner))
    ref = jax.block_until_ready(_reference_forward(x, params, C_inner))

    # bf16 matmul operands + approx reciprocal -> loosened tolerance vs f32 ref.
    np.testing.assert_allclose(np.asarray(out), np.asarray(ref),
                               rtol=2e-2, atol=2e-2)

    print("KERNEL_OK")
</pallas_src>

<mosaic_0001>
module attributes {stable_mosaic.version = 11 : i64} {
  func.func @_nonlocal_kernel(%arg0: i32, %arg1: i32, %arg2: memref<1x8x256xf32, #tpu.memory_space<vmem>>, %arg3: memref<1x64x16xbf16, #tpu.memory_space<vmem>>, %arg4: memref<1x16x64xbf16, #tpu.memory_space<vmem>>, %arg5: memref<16x8xbf16, #tpu.memory_space<vmem>>, %arg6: memref<16x1xf32, #tpu.memory_space<vmem>>, %arg7: memref<8x16xbf16, #tpu.memory_space<vmem>>, %arg8: memref<8x1xf32, #tpu.memory_space<vmem>>, %arg9: memref<1x8x256xf32, #tpu.memory_space<vmem>>) attributes {dimension_semantics = [#tpu.dimension_semantics<parallel>, #tpu.dimension_semantics<parallel>], iteration_bounds = array<i64: 2, 1>, scalar_prefetch = 0 : i64, scratch_operands = 0 : i64, tpu.core_type = #tpu.core_type<tc>, window_params = [{transform_indices = @transform_0, window_bounds = array<i64: 1, 8, 256>}, {transform_indices = @transform_1, window_bounds = array<i64: 1, 64, 16>}, {transform_indices = @transform_2, window_bounds = array<i64: 1, 16, 64>}, {pipeline_mode = #tpu.pipeline_mode<synchronous>, transform_indices = @transform_3, window_bounds = array<i64: 16, 8>}, {pipeline_mode = #tpu.pipeline_mode<synchronous>, transform_indices = @transform_4, window_bounds = array<i64: 16, 1>}, {pipeline_mode = #tpu.pipeline_mode<synchronous>, transform_indices = @transform_5, window_bounds = array<i64: 8, 16>}, {pipeline_mode = #tpu.pipeline_mode<synchronous>, transform_indices = @transform_6, window_bounds = array<i64: 8, 1>}, {transform_indices = @transform_7, window_bounds = array<i64: 1, 8, 256>}]} {
    %c0 = arith.constant 0 : index
    %c0_0 = arith.constant 0 : index
    %c0_1 = arith.constant 0 : index
    %0 = vector.load %arg2[%c0, %c0_0, %c0_1] : memref<1x8x256xf32, #tpu.memory_space<vmem>>, vector<1x8x256xf32>
    %1 = vector.shape_cast %0 : vector<1x8x256xf32> to vector<8x256xf32>
    %2 = arith.truncf %1 : vector<8x256xf32> to vector<8x256xbf16>
    %c0_2 = arith.constant 0 : index
    %c0_3 = arith.constant 0 : index
    %3 = vector.load %arg5[%c0_2, %c0_3] : memref<16x8xbf16, #tpu.memory_space<vmem>>, vector<16x8xbf16>
    %cst = arith.constant dense<0.000000e+00> : vector<16x256xf32>
    %4 = tpu.matmul %3, %2, %cst {dimension_numbers = #tpu.dot_dimension_numbers<[1], [0], [0], [1], [0, 0, 1, 1], [], []>} : vector<16x8xbf16>, vector<8x256xbf16>, vector<16x256xf32> -> vector<16x256xf32>
    %c0_4 = arith.constant 0 : index
    %c0_5 = arith.constant 0 : index
    %5 = vector.load %arg6[%c0_4, %c0_5] : memref<16x1xf32, #tpu.memory_space<vmem>>, vector<16x1xf32>
    %6 = vector.broadcast %5 : vector<16x1xf32> to vector<16x256xf32>
    %7 = arith.addf %4, %6 : vector<16x256xf32>
    %8 = arith.truncf %7 : vector<16x256xf32> to vector<16x256xbf16>
    %c0_6 = arith.constant 0 : index
    %c0_7 = arith.constant 0 : index
    %c0_8 = arith.constant 0 : index
    %9 = vector.load %arg3[%c0_6, %c0_7, %c0_8] : memref<1x64x16xbf16, #tpu.memory_space<vmem>>, vector<1x64x16xbf16>
    %10 = vector.shape_cast %9 : vector<1x64x16xbf16> to vector<64x16xbf16>
    %c0_9 = arith.constant 0 : index
    %c0_10 = arith.constant 0 : index
    %c0_11 = arith.constant 0 : index
    %11 = vector.load %arg4[%c0_9, %c0_10, %c0_11] : memref<1x16x64xbf16, #tpu.memory_space<vmem>>, vector<1x16x64xbf16>
    %12 = vector.shape_cast %11 : vector<1x16x64xbf16> to vector<16x64xbf16>
    %cst_12 = arith.constant dense<0.000000e+00> : vector<64x256xf32>
    %13 = tpu.matmul %10, %8, %cst_12 {dimension_numbers = #tpu.dot_dimension_numbers<[1], [0], [0], [1], [0, 0, 1, 1], [], []>} : vector<64x16xbf16>, vector<16x256xbf16>, vector<64x256xf32> -> vector<64x256xf32>
    %cst_13 = arith.constant dense<0xFF800000> : vector<256xf32>
    %14 = vector.multi_reduction <maximumf>, %13, %cst_13 [0] : vector<64x256xf32> to vector<256xf32>
    %15 = vector.shape_cast %14 : vector<256xf32> to vector<1x256xf32>
    %16 = vector.broadcast %15 : vector<1x256xf32> to vector<64x256xf32>
    %17 = arith.subf %13, %16 : vector<64x256xf32>
    %18 = math.exp %17 : vector<64x256xf32>
    %cst_14 = arith.constant dense<0.000000e+00> : vector<256xf32>
    %19 = vector.multi_reduction <add>, %18, %cst_14 [0] : vector<64x256xf32> to vector<256xf32>
    %20 = vector.shape_cast %19 : vector<256xf32> to vector<1x256xf32>
    %21 = arith.truncf %18 : vector<64x256xf32> to vector<64x256xbf16>
    %cst_15 = arith.constant dense<0.000000e+00> : vector<16x256xf32>
    %22 = tpu.matmul %12, %21, %cst_15 {dimension_numbers = #tpu.dot_dimension_numbers<[1], [0], [0], [1], [0, 0, 1, 1], [], []>} : vector<16x64xbf16>, vector<64x256xbf16>, vector<16x256xf32> -> vector<16x256xf32>
    %c0_16 = arith.constant 0 : index
    %c0_17 = arith.constant 0 : index
    %23 = vector.load %arg7[%c0_16, %c0_17] : memref<8x16xbf16, #tpu.memory_space<vmem>>, vector<8x16xbf16>
    %24 = arith.truncf %22 : vector<16x256xf32> to vector<16x256xbf16>
    %cst_18 = arith.constant dense<0.000000e+00> : vector<8x256xf32>
    %25 = tpu.matmul %23, %24, %cst_18 {dimension_numbers = #tpu.dot_dimension_numbers<[1], [0], [0], [1], [0, 0, 1, 1], [], []>} : vector<8x16xbf16>, vector<16x256xbf16>, vector<8x256xf32> -> vector<8x256xf32>
    %26 = tpu.reciprocal %20 {approx = true} : vector<1x256xf32> -> vector<1x256xf32>
    %27 = vector.broadcast %26 : vector<1x256xf32> to vector<8x256xf32>
    %28 = arith.mulf %25, %27 : vector<8x256xf32>
    %c0_19 = arith.constant 0 : index
    %c0_20 = arith.constant 0 : index
    %29 = vector.load %arg8[%c0_19, %c0_20] : memref<8x1xf32, #tpu.memory_space<vmem>>, vector<8x1xf32>
    %30 = vector.broadcast %29 : vector<8x1xf32> to vector<8x256xf32>
    %31 = arith.addf %28, %30 : vector<8x256xf32>
    %32 = arith.addf %31, %1 : vector<8x256xf32>
    %c0_21 = arith.constant 0 : index
    %c0_22 = arith.constant 0 : index
    %c0_23 = arith.constant 0 : index
    %33 = vector.load %arg9[%c0_21, %c0_22, %c0_23] : memref<1x8x256xf32, #tpu.memory_space<vmem>>, vector<1x8x256xf32>
    %34 = vector.shape_cast %33 : vector<1x8x256xf32> to vector<8x256xf32>
    %35 = vector.shape_cast %32 : vector<8x256xf32> to vector<1x8x256xf32>
    tpu.vector_store %arg9[%c0_21, %c0_22, %c0_23], %35 {strides = array<i32>} : memref<1x8x256xf32, #tpu.memory_space<vmem>>, vector<1x8x256xf32>,
    return
  }
  func.func @transform_0(%arg0: i32, %arg1: i32) -> (i32, i32, i32) {
    %c0_i32 = arith.constant 0 : i32
    %c0_i32_0 = arith.constant 0 : i32
    return %arg0, %c0_i32, %arg1 : i32, i32, i32
  }
  func.func @transform_1(%arg0: i32, %arg1: i32) -> (i32, i32, i32) {
    %c0_i32 = arith.constant 0 : i32
    %c0_i32_0 = arith.constant 0 : i32
    %c0_i32_1 = arith.constant 0 : i32
    return %arg0, %c0_i32, %c0_i32_0 : i32, i32, i32
  }
  func.func @transform_2(%arg0: i32, %arg1: i32) -> (i32, i32, i32) {
    %c0_i32 = arith.constant 0 : i32
    %c0_i32_0 = arith.constant 0 : i32
    %c0_i32_1 = arith.constant 0 : i32
    return %arg0, %c0_i32, %c0_i32_0 : i32, i32, i32
  }
  func.func @transform_3(%arg0: i32, %arg1: i32) -> (i32, i32) {
    %c0_i32 = arith.constant 0 : i32
    %c0_i32_0 = arith.constant 0 : i32
    %c0_i32_1 = arith.constant 0 : i32
    return %c0_i32, %c0_i32_0 : i32, i32
  }
  func.func @transform_4(%arg0: i32, %arg1: i32) -> (i32, i32) {
    %c0_i32 = arith.constant 0 : i32
    %c0_i32_0 = arith.constant 0 : i32
    %c0_i32_1 = arith.constant 0 : i32
    return %c0_i32, %c0_i32_0 : i32, i32
  }
  func.func @transform_5(%arg0: i32, %arg1: i32) -> (i32, i32) {
    %c0_i32 = arith.constant 0 : i32
    %c0_i32_0 = arith.constant 0 : i32
    %c0_i32_1 = arith.constant 0 : i32
    return %c0_i32, %c0_i32_0 : i32, i32
  }
  func.func @transform_6(%arg0: i32, %arg1: i32) -> (i32, i32) {
    %c0_i32 = arith.constant 0 : i32
    %c0_i32_0 = arith.constant 0 : i32
    %c0_i32_1 = arith.constant 0 : i32
    return %c0_i32, %c0_i32_0 : i32, i32
  }
  func.func @transform_7(%arg0: i32, %arg1: i32) -> (i32, i32, i32) {
    %c0_i32 = arith.constant 0 : i32
    %c0_i32_0 = arith.constant 0 : i32
    return %arg0, %c0_i32, %arg1 : i32, i32, i32
  }
}

</mosaic_0001>

<llo_original>
// kernel: tpu_custom_call.1
$region0: #{tpu_custom_call.1}
  #allocation0 [shape = 'u32[]', space=smem, size = 0x4, offset = 0x4, fixed_abs, tag = 'smem constant byte address 0x4 - core index']
  #allocation1 [shape = 'u32[144,128]{1,0:T(1,128)}', space=vmem, size = 0x12000, scoped, tag = 'internal scratch']
  %s0 = inlined_call_operand.vmem [shape: f32[2,8,256], index: 0, kind: input, shape index: {}]
  %s1 = inlined_call_operand.vmem [shape: bf16[2,64,16], index: 1, kind: input, shape index: {}]
  %s2 = inlined_call_operand.vmem [shape: bf16[2,16,64], index: 2, kind: input, shape index: {}]
  %s3 = inlined_call_operand.vmem [shape: bf16[16,8], index: 3, kind: input, shape index: {}]
  %s4 = inlined_call_operand.vmem [shape: f32[16,1], index: 4, kind: input, shape index: {}]
  %s5 = inlined_call_operand.vmem [shape: bf16[8,16], index: 5, kind: input, shape index: {}]
  %s6 = inlined_call_operand.vmem [shape: f32[8,1], index: 6, kind: input, shape index: {}]
  %s7 = inlined_call_operand.hbm [shape: f32[2,8,256], index: 7, kind: output, shape index: {}]
  %s8 = sld [smem:[#allocation0]]
  $region61: #{tpu_custom_call.1} parent=0
    _
  %s10 = ssub.s32 1, %s8
  %s11 = scalar_select 0, %s10, %s8
  $region1: #{tpu_custom_call.1} parent=0
    #allocation2 [shape = 'u8[16384]{0}', space=vmem, size = 0x4000, scoped, tag = 'output window, operand 0']
    #allocation3 [shape = 's32[2]{0}', space=sflag, size = 0x8, scoped, tag = 'scoped memory for tpu_custom_call.1']
    %12 = vsyncpa [#allocation3], 0
    %s13 = scalar_lea.sflag [#allocation3], 1
    %14 = vsyncpa %s13, 0
    loop: start=0, step=1, limit=4
    $region2: #{tpu_custom_call.1} parent=1 // loop_pre_header
      _
    $region3: #{tpu_custom_call.1} parent=1 // loop_header
      %s16 = sphi 0, %s20
      %p17 = scmp.ge.s32.totalorder %s16, 4
      %s23 = sphi 0, %s35
      %s24 = sphi 0, %s31
      %s25 = sphi 0, %s23
      %s26 = sphi 0, %s24
      %s27 = sphi 0, %s25
      %s28 = sphi 0, %s26
      %s40 = sphi 0, %s42
      %s43 = sphi 0, %s40
      %s44 = sphi 0, %s43
      %s60 = sphi 0, %s44
      %s66 = sphi 0, %s68
      %s69 = sphi 0, %s66
      %s70 = sphi 0, %s69
      %s86 = sphi 0, %s70
      %s92 = sphi 0, %s94
      %s95 = sphi 0, %s92
      %s96 = sphi 0, %s95
      %s112 = sphi 0, %s96
      %s116 = sphi 0, %s116
      %s118 = sphi 0, %s116
      %s119 = sphi 0, %s118
      %s133 = sphi 0, %s119
      %s137 = sphi 0, %s137
      %s139 = sphi 0, %s137
      %s140 = sphi 0, %s139
      %s154 = sphi 0, %s140
      %s158 = sphi 0, %s158
      %s160 = sphi 0, %s158
      %s161 = sphi 0, %s160
      %s175 = sphi 0, %s161
      %s179 = sphi 0, %s179
      %s181 = sphi 0, %s179
      %s182 = sphi 0, %s181
      %s196 = sphi 0, %s182
      %s204 = sphi 0, %s206
      %s207 = sphi 0, %s204
      %s208 = sphi 0, %s207
      %s224 = sphi 0, %s208
    $region4: #{tpu_custom_call.1} parent=1 // loop_header_branch
      %19 = sbr.rel (%p17) target = $region8
    $region5: #{tpu_custom_call.1} parent=1 // loop_body
      %s21 = ssub.s32 %s16, 1
      %s22 = ssub.s32 %s16, 2
      %s29 = sadd.s32 1, %s24
      %p30 = scmp.ge.s32.totalorder %s29, 1
      %s31 = scalar_select %p30, 0, %s29
      %s32 = sadd.s32 1, %s23
      %s33 = scalar_select %p30, %s32, %s23
      %p34 = scmp.ge.s32.totalorder %s33, 2
      %s35 = scalar_select %p34, 0, %s33
      %s36 = ssub.s32 %s23, %s35
      %s37 = ssub.s32 %s24, %s31
      %s38 = sor.u32 %s36, %s37
      %p39 = scmp.eq.s32.totalorder %s38, 0
      %s41 = sadd.s32 %s40, 1
      %s42 = scalar_select %p39, %s40, %s41
      %p45 = pneg %p39
      %p46 = scmp.eq.s32.totalorder %s16, 1
      %p47 = por %p45, %p46
      %p48 = scmp.ne.s32.totalorder %s40, %s43
      %p49 = scmp.eq.s32.totalorder %s16, 0
      %p50 = por %p48, %p49
      %p51 = scmp.ne.s32.totalorder %s40, %s43
      %p52 = scmp.eq.s32.totalorder %s21, 1
      %p53 = por %p51, %p52
      %p54 = scmp.ne.s32.totalorder %s43, %s44
      %p55 = scmp.eq.s32.totalorder %s21, 0
      %p56 = por %p54, %p55
      %p57 = scmp.ne.s32.totalorder %s43, %s44
      %p58 = scmp.eq.s32.totalorder %s22, 1
      %p59 = por %p57, %p58
      %p61 = scmp.ne.s32.totalorder %s44, %s60
      %p62 = scmp.eq.s32.totalorder %s22, 0
      %p63 = por %p61, %p62
      %s64 = ssub.s32 %s23, %s35
      %p65 = scmp.eq.s32.totalorder %s64, 0
      %s67 = sadd.s32 %s66, 1
      %s68 = scalar_select %p65, %s66, %s67
      %p71 = pneg %p65
      %p72 = scmp.eq.s32.totalorder %s16, 1
      %p73 = por %p71, %p72
      %p74 = scmp.ne.s32.totalorder %s66, %s69
      %p75 = scmp.eq.s32.totalorder %s16, 0
      %p76 = por %p74, %p75
      %p77 = scmp.ne.s32.totalorder %s66, %s69
      %p78 = scmp.eq.s32.totalorder %s21, 1
      %p79 = por %p77, %p78
      %p80 = scmp.ne.s32.totalorder %s69, %s70
      %p81 = scmp.eq.s32.totalorder %s21, 0
      %p82 = por %p80, %p81
      %p83 = scmp.ne.s32.totalorder %s69, %s70
      %p84 = scmp.eq.s32.totalorder %s22, 1
      %p85 = por %p83, %p84
      %p87 = scmp.ne.s32.totalorder %s70, %s86
      %p88 = scmp.eq.s32.totalorder %s22, 0
      %p89 = por %p87, %p88
      %s90 = ssub.s32 %s23, %s35
      %p91 = scmp.eq.s32.totalorder %s90, 0
      %s93 = sadd.s32 %s92, 1
      %s94 = scalar_select %p91, %s92, %s93
      %p97 = pneg %p91
      %p98 = scmp.eq.s32.totalorder %s16, 1
      %p99 = por %p97, %p98
      %p100 = scmp.ne.s32.totalorder %s92, %s95
      %p101 = scmp.eq.s32.totalorder %s16, 0
      %p102 = por %p100, %p101
      %p103 = scmp.ne.s32.totalorder %s92, %s95
      %p104 = scmp.eq.s32.totalorder %s21, 1
      %p105 = por %p103, %p104
      %p106 = scmp.ne.s32.totalorder %s95, %s96
      %p107 = scmp.eq.s32.totalorder %s21, 0
      %p108 = por %p106, %p107
      %p109 = scmp.ne.s32.totalorder %s95, %s96
      %p110 = scmp.eq.s32.totalorder %s22, 1
      %p111 = por %p109, %p110
      %p113 = scmp.ne.s32.totalorder %s96, %s112
      %p114 = scmp.eq.s32.totalorder %s22, 0
      %p115 = por %p113, %p114
      %s117 = sadd.s32 %s116, 1
      %p120 = scmp.eq.s32.totalorder %s16, 1
      %p121 = scmp.ne.s32.totalorder %s116, %s118
      %p122 = scmp.eq.s32.totalorder %s16, 0
      %p123 = por %p121, %p122
      %p124 = scmp.ne.s32.totalorder %s116, %s118
      %p125 = scmp.eq.s32.totalorder %s21, 1
      %p126 = por %p124, %p125
      %p127 = scmp.ne.s32.totalorder %s118, %s119
      %p128 = scmp.eq.s32.totalorder %s21, 0
      %p129 = por %p127, %p128
      %p130 = scmp.ne.s32.totalorder %s118, %s119
      %p131 = scmp.eq.s32.totalorder %s22, 1
      %p132 = por %p130, %p131
      %p134 = scmp.ne.s32.totalorder %s119, %s133
      %p135 = scmp.eq.s32.totalorder %s22, 0
      %p136 = por %p134, %p135
      %s138 = sadd.s32 %s137, 1
      %p141 = scmp.eq.s32.totalorder %s16, 1
      %p142 = scmp.ne.s32.totalorder %s137, %s139
      %p143 = scmp.eq.s32.totalorder %s16, 0
      %p144 = por %p142, %p143
      %p145 = scmp.ne.s32.totalorder %s137, %s139
      %p146 = scmp.eq.s32.totalorder %s21, 1
      %p147 = por %p145, %p146
      %p148 = scmp.ne.s32.totalorder %s139, %s140
      %p149 = scmp.eq.s32.totalorder %s21, 0
      %p150 = por %p148, %p149
      %p151 = scmp.ne.s32.totalorder %s139, %s140
      %p152 = scmp.eq.s32.totalorder %s22, 1
      %p153 = por %p151, %p152
      %p155 = scmp.ne.s32.totalorder %s140, %s154
      %p156 = scmp.eq.s32.totalorder %s22, 0
      %p157 = por %p155, %p156
      %s159 = sadd.s32 %s158, 1
      %p162 = scmp.eq.s32.totalorder %s16, 1
      %p163 = scmp.ne.s32.totalorder %s158, %s160
      %p164 = scmp.eq.s32.totalorder %s16, 0
      %p165 = por %p163, %p164
      %p166 = scmp.ne.s32.totalorder %s158, %s160
      %p167 = scmp.eq.s32.totalorder %s21, 1
      %p168 = por %p166, %p167
      %p169 = scmp.ne.s32.totalorder %s160, %s161
      %p170 = scmp.eq.s32.totalorder %s21, 0
      %p171 = por %p169, %p170
      %p172 = scmp.ne.s32.totalorder %s160, %s161
      %p173 = scmp.eq.s32.totalorder %s22, 1
      %p174 = por %p172, %p173
      %p176 = scmp.ne.s32.totalorder %s161, %s175
      %p177 = scmp.eq.s32.totalorder %s22, 0
      %p178 = por %p176, %p177
      %s180 = sadd.s32 %s179, 1
      %p183 = scmp.eq.s32.totalorder %s16, 1
      %p184 = scmp.ne.s32.totalorder %s179, %s181
      %p185 = scmp.eq.s32.totalorder %s16, 0
      %p186 = por %p184, %p185
      %p187 = scmp.ne.s32.totalorder %s179, %s181
      %p188 = scmp.eq.s32.totalorder %s21, 1
      %p189 = por %p187, %p188
      %p190 = scmp.ne.s32.totalorder %s181, %s182
      %p191 = scmp.eq.s32.totalorder %s21, 0
      %p192 = por %p190, %p191
      %p193 = scmp.ne.s32.totalorder %s181, %s182
      %p194 = scmp.eq.s32.totalorder %s22, 1
      %p195 = por %p193, %p194
      %p197 = scmp.ne.s32.totalorder %s182, %s196
      %p198 = scmp.eq.s32.totalorder %s22, 0
      %p199 = por %p197, %p198
      %s200 = ssub.s32 %s23, %s35
      %s201 = ssub.s32 %s24, %s31
      %s202 = sor.u32 %s200, %s201
      %p203 = scmp.eq.s32.totalorder %s202, 0
      %s205 = sadd.s32 %s204, 1
      %s206 = scalar_select %p203, %s204, %s205
      %p209 = pneg %p203
      %p210 = scmp.eq.s32.totalorder %s16, 1
      %p211 = por %p209, %p210
      %p212 = scmp.ne.s32.totalorder %s204, %s207
      %p213 = scmp.eq.s32.totalorder %s16, 0
      %p214 = por %p212, %p213
      %p215 = scmp.ne.s32.totalorder %s204, %s207
      %p216 = scmp.eq.s32.totalorder %s21, 1
      %p217 = por %p215, %p216
      %p218 = scmp.ne.s32.totalorder %s207, %s208
      %p219 = scmp.eq.s32.totalorder %s21, 0
      %p220 = por %p218, %p219
      %p221 = scmp.ne.s32.totalorder %s207, %s208
      %p222 = scmp.eq.s32.totalorder %s22, 1
      %p223 = por %p221, %p222
      %p225 = scmp.ne.s32.totalorder %s208, %s224
      %p226 = scmp.eq.s32.totalorder %s22, 0
      %p227 = por %p225, %p226
      %p228 = scmp.le.s32.totalorder 1, %s16
      %p229 = scmp.lt.s32.totalorder %s16, 3
      %p230 = pnand %p228, %p229
      %p231 = pneg %p230
      // Predicated region
      $region9: #{tpu_custom_call.1} parent=5 // pred_check
        _
      $region10: #{tpu_custom_call.1} parent=5 // pred_check_branch
        %233 = sbr.rel (%p230) target = $region12
      $region11: #{tpu_custom_call.1} parent=5 // pred_region
        %s234 = ssub.s32 %s16, 1
        // Predicated region
        $region13: #{tpu_custom_call.1} parent=11 // pred_check
          %p235 = pneg %p129
        $region14: #{tpu_custom_call.1} parent=11 // pred_check_branch
          %237 = sbr.rel (%p235) target = $region16
        $region15: #{tpu_custom_call.1} parent=11 // pred_region
          _
        $region16: #{tpu_custom_call.1} parent=11 // pred_fallthru
          _
        // Predicated region
        $region17: #{tpu_custom_call.1} parent=11 // pred_check
          %p238 = pneg %p150
        $region18: #{tpu_custom_call.1} parent=11 // pred_check_branch
          %240 = sbr.rel (%p238) target = $region20
        $region19: #{tpu_custom_call.1} parent=11 // pred_region
          _
        $region20: #{tpu_custom_call.1} parent=11 // pred_fallthru
          _
        // Predicated region
        $region21: #{tpu_custom_call.1} parent=11 // pred_check
          %p241 = pneg %p171
        $region22: #{tpu_custom_call.1} parent=11 // pred_check_branch
          %243 = sbr.rel (%p241) target = $region24
        $region23: #{tpu_custom_call.1} parent=11 // pred_region
          _
        $region24: #{tpu_custom_call.1} parent=11 // pred_fallthru
          _
        // Predicated region
        $region25: #{tpu_custom_call.1} parent=11 // pred_check
          %p244 = pneg %p192
        $region26: #{tpu_custom_call.1} parent=11 // pred_check_branch
          %246 = sbr.rel (%p244) target = $region28
        $region27: #{tpu_custom_call.1} parent=11 // pred_region
          _
        $region28: #{tpu_custom_call.1} parent=11 // pred_fallthru
          _
      $region12: #{tpu_custom_call.1} parent=5 // pred_fallthru
        _
      %p247 = scmp.lt.s32.totalorder %s16, 2
      // Predicated region
      $region29: #{tpu_custom_call.1} parent=5 // pred_check
        %p248 = pneg %p247
      $region30: #{tpu_custom_call.1} parent=5 // pred_check_branch
        %250 = sbr.rel (%p248) target = $region32
      $region31: #{tpu_custom_call.1} parent=5 // pred_region
        // Predicated region
        $region33: #{tpu_custom_call.1} parent=31 // pred_check
          %p251 = pneg %p50
        $region34: #{tpu_custom_call.1} parent=31 // pred_check_branch
          %253 = sbr.rel (%p251) target = $region36
        $region35: #{tpu_custom_call.1} parent=31 // pred_region
          %s254 = smul.u32 2, %s24
          %p255 = scmp.lt.s32.totalorder %s23, 1
          %s256 = scalar_select %p255, %s23, 1
          %p257 = scmp.lt.s32.totalorder %s254, 1
          %s258 = scalar_select %p257, %s254, 1
          %s259 = smul.addr %s256, 2
          %s260 = sadd.s32 %s258, %s259
          %s261 = smul.addr %s260, 8
          %s262 = scalar_lea.vmem %s0, %s261
          %s263 = smul.u32 2, %s24
        $region36: #{tpu_custom_call.1} parent=31 // pred_fallthru
          _
        // Predicated region
        $region37: #{tpu_custom_call.1} parent=31 // pred_check
          %p264 = pneg %p76
        $region38: #{tpu_custom_call.1} parent=31 // pred_check_branch
          %266 = sbr.rel (%p264) target = $region40
        $region39: #{tpu_custom_call.1} parent=31 // pred_region
          %p267 = scmp.lt.s32.totalorder %s23, 1
          %s268 = scalar_select %p267, %s23, 1
          %s269 = smul.addr %s268, 8
          %s270 = smul.addr %s269, 4
          %s271 = scalar_lea.vmem %s1, %s270
        $region40: #{tpu_custom_call.1} parent=31 // pred_fallthru
          _
        // Predicated region
        $region41: #{tpu_custom_call.1} parent=31 // pred_check
          %p272 = pneg %p102
        $region42: #{tpu_custom_call.1} parent=31 // pred_check_branch
          %274 = sbr.rel (%p272) target = $region44
        $region43: #{tpu_custom_call.1} parent=31 // pred_region
          %p275 = scmp.lt.s32.totalorder %s23, 1
          %s276 = scalar_select %p275, %s23, 1
          %s277 = smul.addr %s276, 2
          %s278 = smul.addr %s277, 4
          %s279 = scalar_lea.vmem %s2, %s278
        $region44: #{tpu_custom_call.1} parent=31 // pred_fallthru
          _
      $region32: #{tpu_custom_call.1} parent=5 // pred_fallthru
        _
      %p280 = scmp.le.s32.totalorder 1, %s16
      %p281 = scmp.lt.s32.totalorder %s16, 3
      %p282 = pnand %p280, %p281
      %p283 = pneg %p282
      // Predicated region
      $region45: #{tpu_custom_call.1} parent=5 // pred_check
        _
      $region46: #{tpu_custom_call.1} parent=5 // pred_check_branch
        %285 = sbr.rel (%p282) target = $region48
      $region47: #{tpu_custom_call.1} parent=5 // pred_region
        %s286 = ssub.s32 %s16, 1
        %s287 = smul.u32 2, %s26
        %p288 = scmp.lt.s32.totalorder %s25, 1
        %s289 = scalar_select %p288, %s25, 1
        %p290 = scmp.lt.s32.totalorder %s287, 1
        %s291 = scalar_select %p290, %s287, 1
        %s292 = smul.addr %s289, 2
        %s293 = sadd.s32 %s291, %s292
        %s294 = smul.addr %s293, 8
        %s295 = scalar_lea.vmem %s0, %s294
        %p296 = pneg %p56
        %p297 = pneg %p53
        %p298 = scmp.lt.s32.totalorder %s25, 1
        %s299 = scalar_select %p298, %s25, 1
        %s300 = smul.addr %s299, 8
        %s301 = smul.addr %s300, 4
        %s302 = scalar_lea.vmem %s1, %s301
        %p303 = pneg %p82
        %p304 = pneg %p79
        %p305 = scmp.lt.s32.totalorder %s25, 1
        %s306 = scalar_select %p305, %s25, 1
        %s307 = smul.addr %s306, 2
        %s308 = smul.addr %s307, 4
        %s309 = scalar_lea.vmem %s2, %s308
        %p310 = pneg %p108
        %p311 = pneg %p105
        %p312 = pneg %p129
        %p313 = pneg %p126
        %p314 = pneg %p150
        %p315 = pneg %p147
        %p316 = pneg %p171
        %p317 = pneg %p168
        %p318 = pneg %p192
        %p319 = pneg %p189
        %p320 = pneg %p220
        %p321 = pneg %p217
        %s322 = sand.u32 %s207, 1
        %s323 = scalar_lea.sflag [#allocation3], %s322
        %s324 = sand.u32 %s207, 1
        %s325 = smul.addr %s324, 16
        %s326 = scalar_lea.vmem [#allocation2], %s325
        %s327 = smul.u32 2, %s26
        %p328 = scmp.lt.s32.totalorder %s25, 1
        %s329 = scalar_select %p328, %s25, 1
        %p330 = scmp.lt.s32.totalorder %s327, 1
        %s331 = scalar_select %p330, %s327, 1
        %s332 = smul.addr %s329, 2
        %s333 = sadd.s32 %s331, %s332
        %s334 = smul.addr %s333, 8
        %s335 = scalar_lea.vmem %s0, %s334
        %s336 = smul.u32 2, %s26
        %p337 = scmp.lt.s32.totalorder %s25, 1
        %s338 = scalar_select %p337, %s25, 1
        %s339 = smul.addr %s338, 8
        %s340 = smul.addr %s339, 4
        %s341 = scalar_lea.vmem %s1, %s340
        %p342 = scmp.lt.s32.totalorder %s25, 1
        %s343 = scalar_select %p342, %s25, 1
        %s344 = smul.addr %s343, 2
        %s345 = smul.addr %s344, 4
        %s346 = scalar_lea.vmem %s2, %s345
        %s347 = smul.u32 2, %s26
        %v349 = vld [vmem:[%s335] sm:$0xff]
        %v350 = vld [vmem:[%s335 + $0x8] sm:$0xff]
        %v351 = vpack.c.bf16 %v349, %v349
        %v352 = vpack.c.bf16 %v350, %v350
        %v353 = vld [vmem:[%s3] sm:$0xf]
        %v354 = vld [vmem:[%s3 + $0x4] sm:$0xf]
        %v355 = vld [vmem:[%s4] sm:$0xff]
        %v356 = vld [vmem:[%s4 + $0x8] sm:$0xff]
        %358 = vset.pattern.permute.xlu0 0
        %359 = vperm.xlu0 %358, %v355
        %v360 = vpop.permute.xlu0 %359
        %363 = vset.pattern.permute.xlu0 0
        %364 = vperm.xlu0 %363, %v356
        %v365 = vpop.permute.xlu0 %364
        %v369 = vunpack.c.l.b16 %v353
        %v370 = vunpack.c.l.b16 %v354
        %v371 = vpack.c.b16 %v370, %v369
        %vm372 = vcmask 64512
        %v374 = vsel %vm372, %v371, 0
        %vm376 = vcmask 1043456
        %v378 = vsel %vm376, %v351, 0
        %v381 = vsel %vm376, %v352, 0
        %383 = vmatprep.subr.bf16.mxu0 %v381
        %384 = vmatpush1.bf16.msra.mxu0 %v378
        %385 = vmatprep.subr.bf16.mxu0 0
        %386 = vmatpush1.bf16.msra.mxu0 0
        %387 = vmatprep.subr.bf16.mxu0 0
        %388 = vmatpush1.bf16.msra.mxu0 0
        %389 = vmatprep.subr.bf16.mxu0 0
        %390 = vmatpush1.bf16.msra.mxu0 0
        %391 = vmatprep.subr.bf16.mxu0 0
        %392 = vmatpush1.bf16.msra.mxu0 0
        %393 = vmatprep.subr.bf16.mxu0 0
        %394 = vmatpush1.bf16.msra.mxu0 0
        %395 = vmatprep.subr.bf16.mxu0 0
        %396 = vmatpush1.bf16.msra.mxu0 0
        %397 = vmatprep.subr.bf16.mxu0 0
        %398 = vmatpush1.bf16.msra.mxu0 0
        %399 = vmatprep.subr.bf16.mxu0 0
        %400 = vmatpush1.bf16.msra.mxu0 0
        %401 = vmatprep.subr.bf16.mxu0 0
        %402 = vmatpush1.bf16.msra.mxu0 0
        %403 = vmatprep.subr.bf16.mxu0 0
        %404 = vmatpush1.bf16.msra.mxu0 0
        %405 = vmatprep.subr.bf16.mxu0 0
        %406 = vmatpush1.bf16.msra.mxu0 0
        %407 = vmatprep.subr.bf16.mxu0 0
        %408 = vmatpush1.bf16.msra.mxu0 0
        %409 = vmatprep.subr.bf16.mxu0 0
        %410 = vmatpush1.bf16.msra.mxu0 0
        %411 = vmatprep.subr.bf16.mxu0 0
        %412 = vmatpush1.bf16.msra.mxu0 0
        %413 = vmatprep.subr.bf16.mxu0 0
        %414 = vmatpush1.bf16.msra.mxu0 0
        %415 = vmatprep.mubr.bf16.mxu0 0
        %416 = vmatmul.mubr.bf16.gmra.mrb[0].mxu0 %v374
        %v417 = vpop.f32.mrb[0].mxu0
        %v418 = vadd.f32 %v360, %v417
        %v419 = vpop.f32.mrb[0].mxu0
        %v420 = vadd.f32 %v360, %v419
        %v421 = vpop.f32.mrb[0].mxu0
        %v422 = vadd.f32 %v365, %v421
        %v423 = vpop.f32.mrb[0].mxu0
        %v424 = vadd.f32 %v365, %v423
        %425 = vdwg.mxu0
        %v426 = vpack.c.bf16 %v422, %v418
        %v427 = vpack.c.bf16 %v424, %v420
        %v428 = vld [vmem:[%s341] sm:$0xf]
        %v429 = vld [vmem:[%s341 + $0x4] sm:$0xf]
        %v430 = vld [vmem:[%s341 + $0x8] sm:$0xf]
        %v431 = vld [vmem:[%s341 + $0xc] sm:$0xf]
        %v432 = vld [vmem:[%s341 + $0x10] sm:$0xf]
        %v433 = vld [vmem:[%s341 + $0x14] sm:$0xf]
        %v434 = vld [vmem:[%s341 + $0x18] sm:$0xf]
        %v435 = vld [vmem:[%s341 + $0x1c] sm:$0xf]
        %v436 = vld [vmem:[%s346] sm:$0xf]
        %v437 = vld [vmem:[%s346 + $0x4] sm:$0xf]
        %v446 = vunpack.c.l.b16 %v428
        %v447 = vunpack.c.l.b16 %v429
        %v448 = vunpack.c.l.b16 %v430
        %v449 = vunpack.c.l.b16 %v431
        %v450 = vunpack.c.l.b16 %v432
        %v451 = vunpack.c.l.b16 %v433
        %v452 = vunpack.c.l.b16 %v434
        %v453 = vunpack.c.l.b16 %v435
        %v454 = vpack.c.b16 %v447, %v446
        %v455 = vpack.c.b16 %v449, %v448
        %v456 = vpack.c.b16 %v451, %v450
        %v457 = vpack.c.b16 %v453, %v452
        %vm458 = vcmask 130048
        %v460 = vsel %vm458, %v454, 0
        %v463 = vsel %vm458, %v455, 0
        %v466 = vsel %vm458, %v456, 0
        %v469 = vsel %vm458, %v457, 0
        %471 = vmatprep.subr.bf16.mxu0 %v427
        %472 = vmatpush1.bf16.msra.mxu0 %v426
        %473 = vmatprep.subr.bf16.mxu0 0
        %474 = vmatpush1.bf16.msra.mxu0 0
        %475 = vmatprep.subr.bf16.mxu0 0
        %476 = vmatpush1.bf16.msra.mxu0 0
        %477 = vmatprep.subr.bf16.mxu0 0
        %478 = vmatpush1.bf16.msra.mxu0 0
        %479 = vmatprep.subr.bf16.mxu0 0
        %480 = vmatpush1.bf16.msra.mxu0 0
        %481 = vmatprep.subr.bf16.mxu0 0
        %482 = vmatpush1.bf16.msra.mxu0 0
        %483 = vmatprep.subr.bf16.mxu0 0
        %484 = vmatpush1.bf16.msra.mxu0 0
        %485 = vmatprep.subr.bf16.mxu0 0
        %486 = vmatpush1.bf16.msra.mxu0 0
        %487 = vmatprep.subr.bf16.mxu0 0
        %488 = vmatpush1.bf16.msra.mxu0 0
        %489 = vmatprep.subr.bf16.mxu0 0
        %490 = vmatpush1.bf16.msra.mxu0 0
        %491 = vmatprep.subr.bf16.mxu0 0
        %492 = vmatpush1.bf16.msra.mxu0 0
        %493 = vmatprep.subr.bf16.mxu0 0
        %494 = vmatpush1.bf16.msra.mxu0 0
        %495 = vmatprep.subr.bf16.mxu0 0
        %496 = vmatpush1.bf16.msra.mxu0 0
        %497 = vmatprep.subr.bf16.mxu0 0
        %498 = vmatpush1.bf16.msra.mxu0 0
        %499 = vmatprep.subr.bf16.mxu0 0
        %500 = vmatpush1.bf16.msra.mxu0 0
        %501 = vmatprep.subr.bf16.mxu0 0
        %502 = vmatpush1.bf16.msra.mxu0 0
        %503 = vmatprep.mubr.bf16.mxu0 0
        %504 = vmatmul.mubr.bf16.gmra.mrb[0].mxu0 %v460
        %v505 = vpop.f32.mrb[0].mxu0
        %v506 = vadd.f32 0.0, %v505
        %v507 = vpop.f32.mrb[0].mxu0
        %v508 = vadd.f32 0.0, %v507
        %v509 = vpop.f32.mrb[0].mxu0
        %v510 = vadd.f32 0.0, %v509
        %v511 = vpop.f32.mrb[0].mxu0
        %v512 = vadd.f32 0.0, %v511
        %513 = vmatprep.mubr.bf16.mxu0 0
        %514 = vmatmul.mubr.bf16.gmra.mrb[0].mxu0 %v463
        %v515 = vpop.f32.mrb[0].mxu0
        %v516 = vadd.f32 0.0, %v515
        %v517 = vpop.f32.mrb[0].mxu0
        %v518 = vadd.f32 0.0, %v517
        %v519 = vpop.f32.mrb[0].mxu0
        %v520 = vadd.f32 0.0, %v519
        %v521 = vpop.f32.mrb[0].mxu0
        %v522 = vadd.f32 0.0, %v521
        %523 = vmatprep.mubr.bf16.mxu0 0
        %524 = vmatmul.mubr.bf16.gmra.mrb[0].mxu0 %v466
        %v525 = vpop.f32.mrb[0].mxu0
        %v526 = vadd.f32 0.0, %v525
        %v527 = vpop.f32.mrb[0].mxu0
        %v528 = vadd.f32 0.0, %v527
        %v529 = vpop.f32.mrb[0].mxu0
        %v530 = vadd.f32 0.0, %v529
        %v531 = vpop.f32.mrb[0].mxu0
        %v532 = vadd.f32 0.0, %v531
        %533 = vmatprep.mubr.bf16.mxu0 0
        %534 = vmatmul.mubr.bf16.gmra.mrb[0].mxu0 %v469
        %v535 = vpop.f32.mrb[0].mxu0
        %v536 = vadd.f32 0.0, %v535
        %v537 = vpop.f32.mrb[0].mxu0
        %v538 = vadd.f32 0.0, %v537
        %v539 = vpop.f32.mrb[0].mxu0
        %v540 = vadd.f32 0.0, %v539
        %v541 = vpop.f32.mrb[0].mxu0
        %v542 = vadd.f32 0.0, %v541
        %543 = vdwg.mxu0
        %v544 = vmax.f32 %v506, %v516
        %v545 = vmax.f32 %v510, %v520
        %v546 = vmax.f32 %v544, %v526
        %v547 = vmax.f32 %v545, %v530
        %v548 = vmax.f32 %v546, %v536
        %v549 = vmax.f32 %v547, %v540
        %v550 = vmax.f32 %v548, %v549
        %v551 = vrot.slane %v550, 4
        %v552 = vmax.f32 %v550, %v551
        %v553 = vrot.slane %v552, 2
        %v554 = vmax.f32 %v552, %v553
        %v555 = vrot.slane %v554, 1
        %v556 = vmax.f32 %v554, %v555
        %v557 = vmax.f32 %v508, %v518
        %v558 = vmax.f32 %v512, %v522
        %v559 = vmax.f32 %v557, %v528
        %v560 = vmax.f32 %v558, %v532
        %v561 = vmax.f32 %v559, %v538
        %v562 = vmax.f32 %v560, %v542
        %v563 = vmax.f32 %v561, %v562
        %v564 = vrot.slane %v563, 4
        %v565 = vmax.f32 %v563, %v564
        %v566 = vrot.slane %v565, 2
        %v567 = vmax.f32 %v565, %v566
        %v568 = vrot.slane %v567, 1
        %v569 = vmax.f32 %v567, %v568
        %v570 = vsub.f32 %v506, %v556
        %v571 = vsub.f32 %v508, %v569
        %v572 = vsub.f32 %v510, %v556
        %v573 = vsub.f32 %v512, %v569
        %v574 = vsub.f32 %v516, %v556
        %v575 = vsub.f32 %v518, %v569
        %v576 = vsub.f32 %v520, %v556
        %v577 = vsub.f32 %v522, %v569
        %v578 = vsub.f32 %v526, %v556
        %v579 = vsub.f32 %v528, %v569
        %v580 = vsub.f32 %v530, %v556
        %v581 = vsub.f32 %v532, %v569
        %v582 = vsub.f32 %v536, %v556
        %v583 = vsub.f32 %v538, %v569
        %v584 = vsub.f32 %v540, %v556
        %v585 = vsub.f32 %v542, %v569
        %v586 = vmul.f32 %v570, 1.442695
        %v587 = vpow.pop %v586
        %v588 = vmul.f32 %v571, 1.442695
        %v589 = vpow.pop %v588
        %v590 = vmul.f32 %v572, 1.442695
        %v591 = vpow.pop %v590
        %v592 = vmul.f32 %v573, 1.442695
        %v593 = vpow.pop %v592
        %v594 = vmul.f32 %v574, 1.442695
        %v595 = vpow.pop %v594
        %v596 = vmul.f32 %v575, 1.442695
        %v597 = vpow.pop %v596
        %v598 = vmul.f32 %v576, 1.442695
        %v599 = vpow.pop %v598
        %v600 = vmul.f32 %v577, 1.442695
        %v601 = vpow.pop %v600
        %v602 = vmul.f32 %v578, 1.442695
        %v603 = vpow.pop %v602
        %v604 = vmul.f32 %v579, 1.442695
        %v605 = vpow.pop %v604
        %v606 = vmul.f32 %v580, 1.442695
        %v607 = vpow.pop %v606
        %v608 = vmul.f32 %v581, 1.442695
        %v609 = vpow.pop %v608
        %v610 = vmul.f32 %v582, 1.442695
        %v611 = vpow.pop %v610
        %v612 = vmul.f32 %v583, 1.442695
        %v613 = vpow.pop %v612
        %v614 = vmul.f32 %v584, 1.442695
        %v615 = vpow.pop %v614
        %v616 = vmul.f32 %v585, 1.442695
        %v617 = vpow.pop %v616
        %v618 = vadd.f32 %v587, %v591
        %v619 = vadd.f32 %v618, %v595
        %v620 = vadd.f32 %v619, %v599
        %v621 = vadd.f32 %v620, %v603
        %v622 = vadd.f32 %v621, %v607
        %v623 = vadd.f32 %v622, %v611
        %v624 = vadd.f32 %v623, %v615
        %v625 = vrot.slane %v624, 4
        %v626 = vadd.f32 %v624, %v625
        %v627 = vrot.slane %v626, 2
        %v628 = vadd.f32 %v626, %v627
        %v629 = vrot.slane %v628, 1
        %v630 = vadd.f32 %v628, %v629
        %v631 = vadd.f32 %v589, %v593
        %v632 = vadd.f32 %v631, %v597
        %v633 = vadd.f32 %v632, %v601
        %v634 = vadd.f32 %v633, %v605
        %v635 = vadd.f32 %v634, %v609
        %v636 = vadd.f32 %v635, %v613
        %v637 = vadd.f32 %v636, %v617
        %v638 = vrot.slane %v637, 4
        %v639 = vadd.f32 %v637, %v638
        %v640 = vrot.slane %v639, 2
        %v641 = vadd.f32 %v639, %v640
        %v642 = vrot.slane %v641, 1
        %v643 = vadd.f32 %v641, %v642
        %v644 = vpack.c.bf16 %v591, %v587
        %v645 = vpack.c.bf16 %v593, %v589
        %v646 = vpack.c.bf16 %v599, %v595
        %v647 = vpack.c.bf16 %v601, %v597
        %v648 = vpack.c.bf16 %v607, %v603
        %v649 = vpack.c.bf16 %v609, %v605
        %v650 = vpack.c.bf16 %v615, %v611
        %v651 = vpack.c.bf16 %v617, %v613
        %v654 = vunpack.c.l.b16 %v436
        %v655 = vunpack.c.l.b16 %v437
        %v656 = vpack.c.b16 %v655, %v654
        %vm657 = vcmask 523264
        %v659 = vsel %vm657, %v656, 0
        %661 = vmatprep.subr.bf16.mxu0 %v645
        %662 = vmatpush1.bf16.msra.mxu0 %v644
        %663 = vmatprep.subr.bf16.mxu0 %v647
        %664 = vmatpush1.bf16.msra.mxu0 %v646
        %665 = vmatprep.subr.bf16.mxu0 %v649
        %666 = vmatpush1.bf16.msra.mxu0 %v648
        %667 = vmatprep.subr.bf16.mxu0 %v651
        %668 = vmatpush1.bf16.msra.mxu0 %v650
        %669 = vmatprep.subr.bf16.mxu0 0
        %670 = vmatpush1.bf16.msra.mxu0 0
        %671 = vmatprep.subr.bf16.mxu0 0
        %672 = vmatpush1.bf16.msra.mxu0 0
        %673 = vmatprep.subr.bf16.mxu0 0
        %674 = vmatpush1.bf16.msra.mxu0 0
        %675 = vmatprep.subr.bf16.mxu0 0
        %676 = vmatpush1.bf16.msra.mxu0 0
        %677 = vmatprep.subr.bf16.mxu0 0
        %678 = vmatpush1.bf16.msra.mxu0 0
        %679 = vmatprep.subr.bf16.mxu0 0
        %680 = vmatpush1.bf16.msra.mxu0 0
        %681 = vmatprep.subr.bf16.mxu0 0
        %682 = vmatpush1.bf16.msra.mxu0 0
        %683 = vmatprep.subr.bf16.mxu0 0
        %684 = vmatpush1.bf16.msra.mxu0 0
        %685 = vmatprep.subr.bf16.mxu0 0
        %686 = vmatpush1.bf16.msra.mxu0 0
        %687 = vmatprep.subr.bf16.mxu0 0
        %688 = vmatpush1.bf16.msra.mxu0 0
        %689 = vmatprep.subr.bf16.mxu0 0
        %690 = vmatpush1.bf16.msra.mxu0 0
        %691 = vmatprep.subr.bf16.mxu0 0
        %692 = vmatpush1.bf16.msra.mxu0 0
        %693 = vmatprep.mubr.bf16.mxu0 0
        %694 = vmatmul.mubr.bf16.gmra.mrb[0].mxu0 %v659
        %v695 = vpop.f32.mrb[0].mxu0
        %v696 = vadd.f32 0.0, %v695
        %v697 = vpop.f32.mrb[0].mxu0
        %v698 = vadd.f32 0.0, %v697
        %v699 = vpop.f32.mrb[0].mxu0
        %v700 = vadd.f32 0.0, %v699
        %v701 = vpop.f32.mrb[0].mxu0
        %v702 = vadd.f32 0.0, %v701
        %703 = vdwg.mxu0
        %v704 = vld [vmem:[%s5] sm:$0xf]
        %v705 = vpack.c.bf16 %v700, %v696
        %v706 = vpack.c.bf16 %v702, %v698
        %v708 = vsel %vm458, %v704, 0
        %710 = vmatprep.subr.bf16.mxu0 %v706
        %711 = vmatpush1.bf16.msra.mxu0 %v705
        %712 = vmatprep.subr.bf16.mxu0 0
        %713 = vmatpush1.bf16.msra.mxu0 0
        %714 = vmatprep.subr.bf16.mxu0 0
        %715 = vmatpush1.bf16.msra.mxu0 0
        %716 = vmatprep.subr.bf16.mxu0 0
        %717 = vmatpush1.bf16.msra.mxu0 0
        %718 = vmatprep.subr.bf16.mxu0 0
        %719 = vmatpush1.bf16.msra.mxu0 0
        %720 = vmatprep.subr.bf16.mxu0 0
        %721 = vmatpush1.bf16.msra.mxu0 0
        %722 = vmatprep.subr.bf16.mxu0 0
        %723 = vmatpush1.bf16.msra.mxu0 0
        %724 = vmatprep.subr.bf16.mxu0 0
        %725 = vmatpush1.bf16.msra.mxu0 0
        %726 = vmatprep.subr.bf16.mxu0 0
        %727 = vmatpush1.bf16.msra.mxu0 0
        %728 = vmatprep.subr.bf16.mxu0 0
        %729 = vmatpush1.bf16.msra.mxu0 0
        %730 = vmatprep.subr.bf16.mxu0 0
        %731 = vmatpush1.bf16.msra.mxu0 0
        %732 = vmatprep.subr.bf16.mxu0 0
        %733 = vmatpush1.bf16.msra.mxu0 0
        %734 = vmatprep.subr.bf16.mxu0 0
        %735 = vmatpush1.bf16.msra.mxu0 0
        %736 = vmatprep.subr.bf16.mxu0 0
        %737 = vmatpush1.bf16.msra.mxu0 0
        %738 = vmatprep.subr.bf16.mxu0 0
        %739 = vmatpush1.bf16.msra.mxu0 0
        %740 = vmatprep.subr.bf16.mxu0 0
        %741 = vmatpush1.bf16.msra.mxu0 0
        %742 = vmatprep.mubr.bf16.mxu0 0
        %743 = vmatmul.mubr.bf16.gmra.mrb[0].mxu0 %v708
        %v744 = vpop.f32.mrb[0].mxu0
        %v745 = vadd.f32 0.0, %v744
        %v746 = vpop.f32.mrb[0].mxu0
        %v747 = vadd.f32 0.0, %v746
        %v748 = vpop.f32.mrb[0].mxu0
        %v749 = vpop.f32.mrb[0].mxu0
        %750 = vdwg.mxu0
        %v751 = vrcp.pop %v630
        %v752 = vrcp.pop %v643
        %v753 = vmul.f32 %v745, %v751
        %v754 = vmul.f32 %v747, %v752
        %v755 = vld [vmem:[%s6] sm:$0xff]
        %757 = vset.pattern.permute.xlu0 0
        %758 = vperm.xlu0 %757, %v755
        %v759 = vpop.permute.xlu0 %758
        %v761 = vadd.f32 %v753, %v759
        %v762 = vadd.f32 %v754, %v759
        %v763 = vadd.f32 %v761, %v349
        %v764 = vadd.f32 %v762, %v350
        %765 = vst [vmem:[%s326] sm:$0xff] %v763
        %766 = vst [vmem:[%s326 + $0x8] sm:$0xff] %v764
        %s767 = sand.u32 %s207, 1
        %s768 = scalar_lea.sflag [#allocation3], %s767
        %s769 = sand.u32 %s207, 1
        %s770 = smul.addr %s769, 16
        %s771 = scalar_lea.vmem [#allocation2], %s770
        // Predicated region
        $region49: #{tpu_custom_call.1} parent=47 // pred_check
          %p772 = pneg %p217
        $region50: #{tpu_custom_call.1} parent=47 // pred_check_branch
          %774 = sbr.rel (%p772) target = $region52
        $region51: #{tpu_custom_call.1} parent=47 // pred_region
          %s775 = smul.u32 2, %s26
          %s777 = ssub.s32 256, 256
          %778 = vsyncadd %s768, %s777
          %s779 = smul.addr %s25, 2
          %s780 = sadd.s32 %s775, %s779
          %s781 = smul.addr %s780, 128
          %s782 = scalar_lea.hbm %s7, %s781
          %s784 = sshll.u32 %s771, 4
          %s785 = int_to_ptr.vmem [resolvable:$true] %s784
          %787 = dma.vmem_to_hbm [thread:$0]  %s785, 256, %s782, %s768
        $region52: #{tpu_custom_call.1} parent=47 // pred_fallthru
          _
      $region48: #{tpu_custom_call.1} parent=5 // pred_fallthru
        _
      %p788 = scmp.le.s32.totalorder 2, %s16
      // Predicated region
      $region53: #{tpu_custom_call.1} parent=5 // pred_check
        %p789 = pneg %p788
      $region54: #{tpu_custom_call.1} parent=5 // pred_check_branch
        %791 = sbr.rel (%p789) target = $region56
      $region55: #{tpu_custom_call.1} parent=5 // pred_region
        %s792 = ssub.s32 %s16, 2
        // Predicated region
        $region57: #{tpu_custom_call.1} parent=55 // pred_check
          %p793 = pneg %p223
        $region58: #{tpu_custom_call.1} parent=55 // pred_check_branch
          %795 = sbr.rel (%p793) target = $region60
        $region59: #{tpu_custom_call.1} parent=55 // pred_region
          %s796 = sand.u32 %s208, 1
          %s797 = scalar_lea.sflag [#allocation3], %s796
          %s798 = sand.u32 %s208, 1
          %s799 = smul.addr %s798, 16
          %s800 = scalar_lea.vmem [#allocation2], %s799
          %801 = dma.done %s797, 256
        $region60: #{tpu_custom_call.1} parent=55 // pred_fallthru
          _
      $region56: #{tpu_custom_call.1} parent=5 // pred_fallthru
        _
    $region6: #{tpu_custom_call.1} parent=1 // loop_footer
      %s20 = sadd.s32 1, %s16
    $region7: #{tpu_custom_call.1} parent=1 // loop_footer_branch
      %15 = sbr.rel target = $region3
    $region8: #{tpu_custom_call.1} parent=1 // loop_exit
      _
    %802 = vsyncpa [#allocation3], 1
    %s803 = scalar_lea.sflag [#allocation3], 1
    %804 = vsyncpa %s803, 1

</llo_original>
